<compile_context>
chip_gen: v6e
topology: v6e:2x2x1
jax: 0.10.0
libtpu: 0.0.40
codegen_flags: <defaults>
</compile_context>

<pallas_src>
import functools

import numpy as np
import jax
import jax.numpy as jnp
from jax.experimental import pallas as pl
from jax.experimental.pallas import tpu as pltpu


def _round_up(n, m):
    return ((n + m - 1) // m) * m


def _capsule_kernel(x_ref, w_ref, g_ref, o_ref):
    # Read f32 activations straight from HBM, cast to bf16 on the VPU right
    # before the MXU matmul; accumulate in f32.
    x = x_ref[...].astype(jnp.bfloat16)
    # s[b, u*D + d] = sum_{k,i} x[b, k*C + i] * wf[k*C + i, u*D + d]
    s = jnp.dot(x, w_ref[...], preferred_element_type=jnp.float32)      # (TB, UDp)

    # squash: mag_sq[b, d] = sum_u s[b, u*D + d]^2, broadcast back across u.
    # Done with one MXU matmul against the 0/1 matrix g (reduce + broadcast in
    # lane-dense form; frees VPU/XLU slots in the epilogue).
    s2 = s * s
    mag_sq = jnp.dot(s2.astype(jnp.bfloat16), g_ref[...],
                     preferred_element_type=jnp.float32)                 # (TB, UDp)

    # factor = mag / (1 + mag_sq)  ( == mag_sq/(1+mag_sq) * 1/mag, but 0-safe ).
    # sqrt + approx reciprocal use the EUP slot; single fused multiply to store.
    factor = jnp.sqrt(mag_sq) * pl.reciprocal(1.0 + mag_sq, approx=True)
    o_ref[...] = (s * factor).astype(o_ref.dtype)


def prepare_capsule_weights(W):
    """One-time weight prep: run at parameter-load time, NOT per forward.

    W: (1, in_channels, num_units, unit_size, in_units) f32.
    Returns (wf, g):
      wf: (in_units*in_channels, UDp) bf16 with wf[k*C+i, u*D+d] = W[0,i,u,d,k]
          (row order matches x.reshape(B, K*C): no activation transpose needed),
          columns zero-padded to UDp = round_up(num_units*unit_size, 128).
      g : (UDp, UDp) bf16 squash reduce/broadcast matrix.
    """
    _, C, U, D, K = W.shape
    UD = U * D
    UDp = _round_up(UD, 128)

    wf = jnp.transpose(W[0], (3, 0, 1, 2)).reshape(K * C, UD)
    wf = jnp.pad(wf, ((0, 0), (0, UDp - UD))).astype(jnp.bfloat16)

    cols = np.arange(UDp)
    valid = cols < UD
    g_np = (((cols[:, None] % D) == (cols[None, :] % D))
            & valid[:, None] & valid[None, :])
    g = jnp.asarray(g_np, dtype=jnp.bfloat16)
    return wf, g


def secondary_capsule_forward(x, wf, g, *, num_units, unit_size, block_b=2048):
    """x: (B, in_units, in_channels) f32; (wf, g): from prepare_capsule_weights.
    Returns (B, num_units, unit_size, 1) f32 -- same as the PyTorch module."""
    B, in_units, in_channels = x.shape
    CK = in_units * in_channels
    UD = num_units * unit_size
    UDp = wf.shape[1]
    assert wf.shape == (CK, UDp) and UDp % 128 == 0 and UDp >= UD, wf.shape
    assert g.shape == (UDp, UDp), g.shape

    # xf[b, k*C + i] = x[b, k, i]: a plain reshape (no HBM transpose/cast pass).
    xf = x.reshape(B, CK)

    # Batch tiling: TB multiple of 8, up to block_b (amortizes ~0.35us/step).
    TB = min(block_b, _round_up(B, 8))
    # If a single tile would cover the whole batch but the batch is sizeable,
    # split into >=2 grid steps so "parallel" can shard across v7x's 2 TCs.
    if pl.cdiv(B, TB) == 1 and TB >= 256:
        TB = _round_up(pl.cdiv(B, 2), 8)
    grid = (pl.cdiv(B, TB),)
    # No jnp.pad of the batch: Pallas handles the ragged edge block (rows are
    # independent; garbage rows in the edge block are never written back).

    out = pl.pallas_call(
        _capsule_kernel,
        out_shape=jax.ShapeDtypeStruct((B, UDp), jnp.float32),
        grid=grid,
        in_specs=[
            pl.BlockSpec((TB, CK), lambda i: (i, 0)),     # batch-tiled activations
            pl.BlockSpec((CK, UDp), lambda i: (0, 0)),    # weights: VMEM-resident
            pl.BlockSpec((UDp, UDp), lambda i: (0, 0)),   # squash matrix: resident
        ],
        out_specs=pl.BlockSpec((TB, UDp), lambda i: (i, 0)),
        compiler_params=pltpu.CompilerParams(
            dimension_semantics=("parallel",),            # shard batch tiles across TCs
            vmem_limit_bytes=32 * 1024 * 1024,            # safe on v5e/v6e/v7x
        ),
    )(xf, wf, g)

    return out[:, :UD].reshape(B, num_units, unit_size, 1)


def reference_forward(x, W, *, num_units, unit_size):
    """Pure-JAX transcription of the PyTorch forward, including the full
    3-iteration routing loop (used only for verification)."""
    B, in_units, in_channels = x.shape
    xt = jnp.transpose(x, (0, 2, 1))                                  # (B,C,K)
    xs = jnp.broadcast_to(xt[:, :, None, :],
                          (B, in_channels, num_units, in_units))[..., None]
    Wb = jnp.broadcast_to(W, (B,) + W.shape[1:])                      # (B,C,U,D,K)
    u_hat = jnp.matmul(Wb, xs)                                        # (B,C,U,D,1)

    b_ij = jnp.zeros((1, in_channels, num_units, 1), jnp.float32)
    v_j = None
    for _ in range(3):
        c_ij = jax.nn.softmax(b_ij, axis=0)                           # == 1 (singleton dim)
        c_ij = jnp.broadcast_to(c_ij, (B,) + c_ij.shape[1:])[..., None]
        s_j = jnp.sum(c_ij * u_hat, axis=1, keepdims=True)            # (B,1,U,D,1)
        mag_sq = jnp.sum(s_j ** 2, axis=2, keepdims=True)
        mag = jnp.sqrt(mag_sq)
        v_j = mag_sq / (1.0 + mag_sq) * (s_j / mag)
        v_j1 = jnp.broadcast_to(v_j, (B, in_channels, num_units, unit_size, 1))
        u_vj1 = jnp.matmul(jnp.swapaxes(u_hat, 3, 4), v_j1)[..., 0]   # (B,C,U,1)
        u_vj1 = jnp.mean(u_vj1, axis=0, keepdims=True)
        b_ij = b_ij + u_vj1
    return jnp.squeeze(v_j, axis=1)                                   # (B,U,D,1)


if __name__ == "__main__":
    B, in_units, in_channels, num_units, unit_size = 2, 8, 32, 4, 16

    key = jax.random.PRNGKey(0)
    kx, kw = jax.random.split(key)
    x = jax.random.normal(kx, (B, in_units, in_channels), jnp.float32)
    # Module parameter: torch.randn(1, in_channels, num_units, unit_size, in_units)
    W = jax.random.normal(kw, (1, in_channels, num_units, unit_size, in_units),
                          jnp.float32)

    # Weight permutation + column padding + bf16 cast hoisted out of forward.
    wf, g = prepare_capsule_weights(W)
    wf = jax.block_until_ready(wf)
    g = jax.block_until_ready(g)

    fwd = jax.jit(functools.partial(secondary_capsule_forward,
                                    num_units=num_units, unit_size=unit_size))
    out = jax.block_until_ready(fwd(x, wf, g))

    ref = reference_forward(x, W, num_units=num_units, unit_size=unit_size)
    np.testing.assert_allclose(np.asarray(out), np.asarray(ref),
                               rtol=2e-2, atol=2e-2)
    print("KERNEL_OK")
</pallas_src>

<mosaic_0001>
module attributes {stable_mosaic.version = 11 : i64} {
  func.func @_capsule_kernel(%arg0: i32, %arg1: memref<8x256xf32, #tpu.memory_space<vmem>>, %arg2: memref<256x128xbf16, #tpu.memory_space<vmem>>, %arg3: memref<128x128xbf16, #tpu.memory_space<vmem>>, %arg4: memref<8x128xf32, #tpu.memory_space<vmem>>) attributes {dimension_semantics = [#tpu.dimension_semantics<parallel>], iteration_bounds = array<i64: 1>, scalar_prefetch = 0 : i64, scratch_operands = 0 : i64, tpu.core_type = #tpu.core_type<tc>, window_params = [{transform_indices = @transform_0, window_bounds = array<i64: 8, 256>}, {pipeline_mode = #tpu.pipeline_mode<synchronous>, transform_indices = @transform_1, window_bounds = array<i64: 256, 128>}, {pipeline_mode = #tpu.pipeline_mode<synchronous>, transform_indices = @transform_2, window_bounds = array<i64: 128, 128>}, {transform_indices = @transform_3, window_bounds = array<i64: 8, 128>}]} {
    %c0 = arith.constant 0 : index
    %c0_0 = arith.constant 0 : index
    %0 = vector.load %arg1[%c0, %c0_0] : memref<8x256xf32, #tpu.memory_space<vmem>>, vector<8x256xf32>
    %1 = arith.truncf %0 : vector<8x256xf32> to vector<8x256xbf16>
    %c0_1 = arith.constant 0 : index
    %c0_2 = arith.constant 0 : index
    %2 = vector.load %arg2[%c0_1, %c0_2] : memref<256x128xbf16, #tpu.memory_space<vmem>>, vector<256x128xbf16>
    %cst = arith.constant dense<0.000000e+00> : vector<8x128xf32>
    %3 = tpu.matmul %1, %2, %cst {dimension_numbers = #tpu.dot_dimension_numbers<[1], [0], [0], [1], [0, 0, 1, 1], [], []>} : vector<8x256xbf16>, vector<256x128xbf16>, vector<8x128xf32> -> vector<8x128xf32>
    %4 = arith.mulf %3, %3 : vector<8x128xf32>
    %5 = arith.truncf %4 : vector<8x128xf32> to vector<8x128xbf16>
    %c0_3 = arith.constant 0 : index
    %c0_4 = arith.constant 0 : index
    %6 = vector.load %arg3[%c0_3, %c0_4] : memref<128x128xbf16, #tpu.memory_space<vmem>>, vector<128x128xbf16>
    %cst_5 = arith.constant dense<0.000000e+00> : vector<8x128xf32>
    %7 = tpu.matmul %5, %6, %cst_5 {dimension_numbers = #tpu.dot_dimension_numbers<[1], [0], [0], [1], [0, 0, 1, 1], [], []>} : vector<8x128xbf16>, vector<128x128xbf16>, vector<8x128xf32> -> vector<8x128xf32>
    %8 = math.sqrt %7 : vector<8x128xf32>
    %cst_6 = arith.constant 1.000000e+00 : f32
    %9 = vector.broadcast %cst_6 : f32 to vector<8x128xf32>
    %10 = arith.addf %9, %7 : vector<8x128xf32>
    %11 = tpu.reciprocal %10 {approx = true} : vector<8x128xf32> -> vector<8x128xf32>
    %12 = arith.mulf %8, %11 : vector<8x128xf32>
    %13 = arith.mulf %3, %12 : vector<8x128xf32>
    %c0_7 = arith.constant 0 : index
    %c0_8 = arith.constant 0 : index
    %14 = vector.load %arg4[%c0_7, %c0_8] : memref<8x128xf32, #tpu.memory_space<vmem>>, vector<8x128xf32>
    tpu.vector_store %arg4[%c0_7, %c0_8], %13 {strides = array<i32>} : memref<8x128xf32, #tpu.memory_space<vmem>>, vector<8x128xf32>,
    return
  }
  func.func @transform_0(%arg0: i32) -> (i32, i32) {
    %c0_i32 = arith.constant 0 : i32
    %c0_i32_0 = arith.constant 0 : i32
    return %arg0, %c0_i32 : i32, i32
  }
  func.func @transform_1(%arg0: i32) -> (i32, i32) {
    %c0_i32 = arith.constant 0 : i32
    %c0_i32_0 = arith.constant 0 : i32
    %c0_i32_1 = arith.constant 0 : i32
    return %c0_i32, %c0_i32_0 : i32, i32
  }
  func.func @transform_2(%arg0: i32) -> (i32, i32) {
    %c0_i32 = arith.constant 0 : i32
    %c0_i32_0 = arith.constant 0 : i32
    %c0_i32_1 = arith.constant 0 : i32
    return %c0_i32, %c0_i32_0 : i32, i32
  }
  func.func @transform_3(%arg0: i32) -> (i32, i32) {
    %c0_i32 = arith.constant 0 : i32
    %c0_i32_0 = arith.constant 0 : i32
    return %arg0, %c0_i32 : i32, i32
  }
}

</mosaic_0001>

<llo_original>
// kernel: secondary_capsule_forward.1
$region0: #{secondary_capsule_forward.1}
  #allocation0 [shape = 'u32[]', space=smem, size = 0x4, offset = 0x4, fixed_abs, tag = 'smem constant byte address 0x4 - core index']
  #allocation1 [shape = 'u32[144,128]{1,0:T(1,128)}', space=vmem, size = 0x12000, scoped, tag = 'internal scratch']
  %s0 = inlined_call_operand.vmem [shape: f32[2,256], index: 0, kind: input, shape index: {}]
  %s1 = inlined_call_operand.hbm [shape: bf16[256,128], index: 1, kind: input, shape index: {}]
  %s2 = inlined_call_operand.hbm [shape: bf16[128,128], index: 2, kind: input, shape index: {}]
  %s3 = inlined_call_operand.vmem [shape: f32[2,128], index: 3, kind: output, shape index: {}]
  %s4 = sld [smem:[#allocation0]]
  $region60: #{secondary_capsule_forward.1} parent=0
    _
  %s6 = ssub.s32 1, %s4
  %s7 = scalar_select 0, %s6, %s4
  $region1: #{secondary_capsule_forward.1} parent=0
    #allocation2 [shape = 'u8[65536]{0}', space=vmem, size = 0x10000, scoped, tag = 'input window, operand 1, single buffered']
    #allocation3 [shape = 's32[1]{0}', space=sflag, size = 0x4, scoped, tag = 'scoped memory for secondary_capsule_forward.1']
    #allocation4 [shape = 'u8[32768]{0}', space=vmem, size = 0x8000, scoped, tag = 'input window, operand 2, single buffered']
    #allocation5 [shape = 's32[1]{0}', space=sflag, size = 0x4, scoped, tag = 'scoped memory for secondary_capsule_forward.1']
    #allocation6 [shape = 'u8[4096]{0}', space=vmem, size = 0x1000, scoped, tag = 'output window, operand 0, single buffered']
    %8 = vsyncpa [#allocation3], 0
    %9 = vsyncpa [#allocation5], 0
    // Predicated region
    $region2: #{secondary_capsule_forward.1} parent=1 // pred_check
      _
    $region3: #{secondary_capsule_forward.1} parent=1 // pred_check_branch
      %11 = sbr.rel (0) target = $region5
    $region4: #{secondary_capsule_forward.1} parent=1 // pred_region
      _
    $region5: #{secondary_capsule_forward.1} parent=1 // pred_fallthru
      _
    // Predicated region
    $region6: #{secondary_capsule_forward.1} parent=1 // pred_check
      _
    $region7: #{secondary_capsule_forward.1} parent=1 // pred_check_branch
      %13 = sbr.rel (0) target = $region9
    $region8: #{secondary_capsule_forward.1} parent=1 // pred_region
      %s15 = ssub.s32 2048, 2048
      %16 = vsyncadd [#allocation3], %s15
      %s17 = sshll.u32 [#allocation2], 4
      %s18 = int_to_ptr.vmem [resolvable:$true] %s17
      %23 = dma.hbm_to_vmem [thread:$0]  %s1, 2048, %s18, [#allocation3], 64, 64, 4
    $region9: #{secondary_capsule_forward.1} parent=1 // pred_fallthru
      _
    // Predicated region
    $region10: #{secondary_capsule_forward.1} parent=1 // pred_check
      _
    $region11: #{secondary_capsule_forward.1} parent=1 // pred_check_branch
      %25 = sbr.rel (0) target = $region13
    $region12: #{secondary_capsule_forward.1} parent=1 // pred_region
      %s27 = ssub.s32 1024, 1024
      %28 = vsyncadd [#allocation5], %s27
      %s29 = sshll.u32 [#allocation4], 4
      %s30 = int_to_ptr.vmem [resolvable:$true] %s29
      %35 = dma.hbm_to_vmem [thread:$0]  %s2, 1024, %s30, [#allocation5], 64, 64, 4
    $region13: #{secondary_capsule_forward.1} parent=1 // pred_fallthru
      _
    // Predicated region
    $region14: #{secondary_capsule_forward.1} parent=1 // pred_check
      _
    $region15: #{secondary_capsule_forward.1} parent=1 // pred_check_branch
      %37 = sbr.rel (0) target = $region17
    $region16: #{secondary_capsule_forward.1} parent=1 // pred_region
      %38 = dma.done [#allocation3], 2048
    $region17: #{secondary_capsule_forward.1} parent=1 // pred_fallthru
      _
    // Predicated region
    $region18: #{secondary_capsule_forward.1} parent=1 // pred_check
      _
    $region19: #{secondary_capsule_forward.1} parent=1 // pred_check_branch
      %40 = sbr.rel (0) target = $region21
    $region20: #{secondary_capsule_forward.1} parent=1 // pred_region
      %41 = dma.done [#allocation5], 1024
    $region21: #{secondary_capsule_forward.1} parent=1 // pred_fallthru
      _
    %v43 = vld [vmem:[%s0] sm:$0xf]
    %v44 = vld [vmem:[%s0 + $0x4] sm:$0xf]
    %v45 = vld [vmem:[%s0 + $0x8] sm:$0xf]
    %v46 = vld [vmem:[%s0 + $0xc] sm:$0xf]
    %v51 = vcombine.low %v43, %v44
    %v52 = vcombine.low %v45, %v46
    %v54 = vunpack.c.l.s4 1983009808
    %v55 = vunpack.c.0.s8 %v54
    %v56 = vlaneseq
    %v57 = vshrl.u32 %v56, 7
    %v58 = vsub.s32 %v55, %v57
    %v59 = vrot.slane %v51, %v58
    %v61 = vunpack.c.l.s4 1983009808
    %v62 = vunpack.c.0.s8 %v61
    %v63 = vlaneseq
    %v64 = vshrl.u32 %v63, 7
    %v65 = vsub.s32 %v62, %v64
    %v66 = vrot.slane %v52, %v65
    %v67 = vcombine.low %v59, %v66
    %v68 = vcombine.high %v59, %v66
    %v71 = vpack.c.bf16 %v67, %v67
    %v72 = vpack.c.bf16 %v68, %v68
    %v73 = vld [vmem:[#allocation2] sm:$0xf]
    %v74 = vld [vmem:[#allocation2 + $0x4] sm:$0xf]
    %v75 = vld [vmem:[#allocation2 + $0x8] sm:$0xf]
    %v76 = vld [vmem:[#allocation2 + $0xc] sm:$0xf]
    %v77 = vld [vmem:[#allocation2 + $0x10] sm:$0xf]
    %v78 = vld [vmem:[#allocation2 + $0x14] sm:$0xf]
    %v79 = vld [vmem:[#allocation2 + $0x18] sm:$0xf]
    %v80 = vld [vmem:[#allocation2 + $0x1c] sm:$0xf]
    %v81 = vld [vmem:[#allocation2 + $0x20] sm:$0xf]
    %v82 = vld [vmem:[#allocation2 + $0x24] sm:$0xf]
    %v83 = vld [vmem:[#allocation2 + $0x28] sm:$0xf]
    %v84 = vld [vmem:[#allocation2 + $0x2c] sm:$0xf]
    %v85 = vld [vmem:[#allocation2 + $0x30] sm:$0xf]
    %v86 = vld [vmem:[#allocation2 + $0x34] sm:$0xf]
    %v87 = vld [vmem:[#allocation2 + $0x38] sm:$0xf]
    %v88 = vld [vmem:[#allocation2 + $0x3c] sm:$0xf]
    %v89 = vld [vmem:[#allocation2 + $0x40] sm:$0xf]
    %v90 = vld [vmem:[#allocation2 + $0x44] sm:$0xf]
    %v91 = vld [vmem:[#allocation2 + $0x48] sm:$0xf]
    %v92 = vld [vmem:[#allocation2 + $0x4c] sm:$0xf]
    %v93 = vld [vmem:[#allocation2 + $0x50] sm:$0xf]
    %v94 = vld [vmem:[#allocation2 + $0x54] sm:$0xf]
    %v95 = vld [vmem:[#allocation2 + $0x58] sm:$0xf]
    %v96 = vld [vmem:[#allocation2 + $0x5c] sm:$0xf]
    %v97 = vld [vmem:[#allocation2 + $0x60] sm:$0xf]
    %v98 = vld [vmem:[#allocation2 + $0x64] sm:$0xf]
    %v99 = vld [vmem:[#allocation2 + $0x68] sm:$0xf]
    %v100 = vld [vmem:[#allocation2 + $0x6c] sm:$0xf]
    %v101 = vld [vmem:[#allocation2 + $0x70] sm:$0xf]
    %v102 = vld [vmem:[#allocation2 + $0x74] sm:$0xf]
    %v103 = vld [vmem:[#allocation2 + $0x78] sm:$0xf]
    %v104 = vld [vmem:[#allocation2 + $0x7c] sm:$0xf]
    %v137 = vunpack.c.l.b16 %v73
    %v138 = vunpack.c.l.b16 %v74
    %v139 = vunpack.c.l.b16 %v75
    %v140 = vunpack.c.l.b16 %v76
    %v141 = vunpack.c.l.b16 %v77
    %v142 = vunpack.c.l.b16 %v78
    %v143 = vunpack.c.l.b16 %v79
    %v144 = vunpack.c.l.b16 %v80
    %v145 = vunpack.c.l.b16 %v81
    %v146 = vunpack.c.l.b16 %v82
    %v147 = vunpack.c.l.b16 %v83
    %v148 = vunpack.c.l.b16 %v84
    %v149 = vunpack.c.l.b16 %v85
    %v150 = vunpack.c.l.b16 %v86
    %v151 = vunpack.c.l.b16 %v87
    %v152 = vunpack.c.l.b16 %v88
    %v153 = vunpack.c.l.b16 %v89
    %v154 = vunpack.c.l.b16 %v90
    %v155 = vunpack.c.l.b16 %v91
    %v156 = vunpack.c.l.b16 %v92
    %v157 = vunpack.c.l.b16 %v93
    %v158 = vunpack.c.l.b16 %v94
    %v159 = vunpack.c.l.b16 %v95
    %v160 = vunpack.c.l.b16 %v96
    %v161 = vunpack.c.l.b16 %v97
    %v162 = vunpack.c.l.b16 %v98
    %v163 = vunpack.c.l.b16 %v99
    %v164 = vunpack.c.l.b16 %v100
    %v165 = vunpack.c.l.b16 %v101
    %v166 = vunpack.c.l.b16 %v102
    %v167 = vunpack.c.l.b16 %v103
    %v168 = vunpack.c.l.b16 %v104
    %v169 = vpack.c.b16 %v138, %v137
    %v170 = vpack.c.b16 %v140, %v139
    %v171 = vpack.c.b16 %v142, %v141
    %v172 = vpack.c.b16 %v144, %v143
    %v173 = vpack.c.b16 %v146, %v145
    %v174 = vpack.c.b16 %v148, %v147
    %v175 = vpack.c.b16 %v150, %v149
    %v176 = vpack.c.b16 %v152, %v151
    %v177 = vpack.c.b16 %v154, %v153
    %v178 = vpack.c.b16 %v156, %v155
    %v179 = vpack.c.b16 %v158, %v157
    %v180 = vpack.c.b16 %v160, %v159
    %v181 = vpack.c.b16 %v162, %v161
    %v182 = vpack.c.b16 %v164, %v163
    %v183 = vpack.c.b16 %v166, %v165
    %v184 = vpack.c.b16 %v168, %v167
    %201 = vmatprep.subr.bf16.mxu0 0
    %202 = vmatpush1.bf16.msra.mxu0 %v176
    %203 = vmatprep.subr.bf16.mxu0 0
    %204 = vmatpush1.bf16.msra.mxu0 %v175
    %205 = vmatprep.subr.bf16.mxu0 0
    %206 = vmatpush1.bf16.msra.mxu0 %v174
    %207 = vmatprep.subr.bf16.mxu0 0
    %208 = vmatpush1.bf16.msra.mxu0 %v173
    %209 = vmatprep.subr.bf16.mxu0 0
    %210 = vmatpush1.bf16.msra.mxu0 %v172
    %211 = vmatprep.subr.bf16.mxu0 0
    %212 = vmatpush1.bf16.msra.mxu0 %v171
    %213 = vmatprep.subr.bf16.mxu0 0
    %214 = vmatpush1.bf16.msra.mxu0 %v170
    %215 = vmatprep.subr.bf16.mxu0 0
    %216 = vmatpush1.bf16.msra.mxu0 %v169
    %217 = vmatprep.subr.bf16.mxu0 0
    %218 = vmatpush2.bf16.msra.mxu0 %v184
    %219 = vmatprep.subr.bf16.mxu0 0
    %220 = vmatpush2.bf16.msra.mxu0 %v183
    %221 = vmatprep.subr.bf16.mxu0 0
    %222 = vmatpush2.bf16.msra.mxu0 %v182
    %223 = vmatprep.subr.bf16.mxu0 0
    %224 = vmatpush2.bf16.msra.mxu0 %v181
    %225 = vmatprep.subr.bf16.mxu0 0
    %226 = vmatpush2.bf16.msra.mxu0 %v180
    %227 = vmatprep.subr.bf16.mxu0 0
    %228 = vmatpush2.bf16.msra.mxu0 %v179
    %229 = vmatprep.subr.bf16.mxu0 0
    %230 = vmatpush2.bf16.msra.mxu0 %v178
    %231 = vmatprep.subr.bf16.mxu0 0
    %232 = vmatpush2.bf16.msra.mxu0 %v177
    %233 = vmatprep.mubr.bf16.mxu0 %v72
    %234 = vmatmul.mubr.bf16.gmra.mxu0 %v71
    %v235 = vpop.f32.mrf.mxu0
    %v236 = vadd.f32 0.0, %v235
    %v237 = vpop.f32.mrf.mxu0
    %v238 = vpop.f32.mrf.mxu0
    %v239 = vpop.f32.mrf.mxu0
    %240 = vdwg.mxu0
    %v241 = vmul.f32 %v236, %v236
    %v242 = vpack.c.bf16 %v241, %v241
    %v243 = vld [vmem:[#allocation4] sm:$0xf]
    %v244 = vld [vmem:[#allocation4 + $0x4] sm:$0xf]
    %v245 = vld [vmem:[#allocation4 + $0x8] sm:$0xf]
    %v246 = vld [vmem:[#allocation4 + $0xc] sm:$0xf]
    %v247 = vld [vmem:[#allocation4 + $0x10] sm:$0xf]
    %v248 = vld [vmem:[#allocation4 + $0x14] sm:$0xf]
    %v249 = vld [vmem:[#allocation4 + $0x18] sm:$0xf]
    %v250 = vld [vmem:[#allocation4 + $0x1c] sm:$0xf]
    %v251 = vld [vmem:[#allocation4 + $0x20] sm:$0xf]
    %v252 = vld [vmem:[#allocation4 + $0x24] sm:$0xf]
    %v253 = vld [vmem:[#allocation4 + $0x28] sm:$0xf]
    %v254 = vld [vmem:[#allocation4 + $0x2c] sm:$0xf]
    %v255 = vld [vmem:[#allocation4 + $0x30] sm:$0xf]
    %v256 = vld [vmem:[#allocation4 + $0x34] sm:$0xf]
    %v257 = vld [vmem:[#allocation4 + $0x38] sm:$0xf]
    %v258 = vld [vmem:[#allocation4 + $0x3c] sm:$0xf]
    %v275 = vunpack.c.l.b16 %v243
    %v276 = vunpack.c.l.b16 %v244
    %v277 = vunpack.c.l.b16 %v245
    %v278 = vunpack.c.l.b16 %v246
    %v279 = vunpack.c.l.b16 %v247
    %v280 = vunpack.c.l.b16 %v248
    %v281 = vunpack.c.l.b16 %v249
    %v282 = vunpack.c.l.b16 %v250
    %v283 = vunpack.c.l.b16 %v251
    %v284 = vunpack.c.l.b16 %v252
    %v285 = vunpack.c.l.b16 %v253
    %v286 = vunpack.c.l.b16 %v254
    %v287 = vunpack.c.l.b16 %v255
    %v288 = vunpack.c.l.b16 %v256
    %v289 = vunpack.c.l.b16 %v257
    %v290 = vunpack.c.l.b16 %v258
    %v291 = vpack.c.b16 %v276, %v275
    %v292 = vpack.c.b16 %v278, %v277
    %v293 = vpack.c.b16 %v280, %v279
    %v294 = vpack.c.b16 %v282, %v281
    %v295 = vpack.c.b16 %v284, %v283
    %v296 = vpack.c.b16 %v286, %v285
    %v297 = vpack.c.b16 %v288, %v287
    %v298 = vpack.c.b16 %v290, %v289
    %307 = vmatprep.subr.bf16.mxu0 0
    %308 = vmatpush1.bf16.msra.mxu0 %v298
    %309 = vmatprep.subr.bf16.mxu0 0
    %310 = vmatpush1.bf16.msra.mxu0 %v297
    %311 = vmatprep.subr.bf16.mxu0 0
    %312 = vmatpush1.bf16.msra.mxu0 %v296
    %313 = vmatprep.subr.bf16.mxu0 0
    %314 = vmatpush1.bf16.msra.mxu0 %v295
    %315 = vmatprep.subr.bf16.mxu0 0
    %316 = vmatpush1.bf16.msra.mxu0 %v294
    %317 = vmatprep.subr.bf16.mxu0 0
    %318 = vmatpush1.bf16.msra.mxu0 %v293
    %319 = vmatprep.subr.bf16.mxu0 0
    %320 = vmatpush1.bf16.msra.mxu0 %v292
    %321 = vmatprep.subr.bf16.mxu0 0
    %322 = vmatpush1.bf16.msra.mxu0 %v291
    %323 = vmatprep.subr.bf16.mxu0 0
    %324 = vmatpush2.bf16.msra.mxu0 0
    %325 = vmatprep.subr.bf16.mxu0 0
    %326 = vmatpush2.bf16.msra.mxu0 0
    %327 = vmatprep.subr.bf16.mxu0 0
    %328 = vmatpush2.bf16.msra.mxu0 0
    %329 = vmatprep.subr.bf16.mxu0 0
    %330 = vmatpush2.bf16.msra.mxu0 0
    %331 = vmatprep.subr.bf16.mxu0 0
    %332 = vmatpush2.bf16.msra.mxu0 0
    %333 = vmatprep.subr.bf16.mxu0 0
    %334 = vmatpush2.bf16.msra.mxu0 0
    %335 = vmatprep.subr.bf16.mxu0 0
    %336 = vmatpush2.bf16.msra.mxu0 0
    %337 = vmatprep.subr.bf16.mxu0 0
    %338 = vmatpush2.bf16.msra.mxu0 0
    %339 = vmatprep.mubr.bf16.mxu0 0
    %340 = vmatmul.mubr.bf16.gmra.mxu0 %v242
    %v341 = vpop.f32.mrf.mxu0
    %v342 = vadd.f32 0.0, %v341
    %v343 = vpop.f32.mrf.mxu0
    %v344 = vpop.f32.mrf.mxu0
    %v345 = vpop.f32.mrf.mxu0
    %346 = vdwg.mxu0
    %v347 = vrsqrt.pop %v342
    %v348 = vmul.f32 %v342, %v347
    %vm349 = vcmp.eq.f32.partialorder %v342, inf
    %v350 = vsel %vm349, %v342, %v348
    %vm351 = vcmp.eq.f32.partialorder %v342, 0.0
    %v352 = vand.u32 %v342, 2147483648
    %v353 = vsel %vm351, %v352, %v350
    %v354 = vadd.f32 %v342, 1.0
    %v355 = vrcp.pop %v354
    %v356 = vmul.f32 %v353, %v355
    %v357 = vmul.f32 %v236, %v356
    %358 = vst [vmem:[#allocation6] sm:$0xff] %v357
    // Predicated region
    $region22: #{secondary_capsule_forward.1} parent=1 // pred_check
      _
    $region23: #{secondary_capsule_forward.1} parent=1 // pred_check_branch
      %360 = sbr.rel (0) target = $region25
    $region24: #{secondary_capsule_forward.1} parent=1 // pred_region
      // Predicated region
      $region26: #{secondary_capsule_forward.1} parent=24 // pred_check
        _
      $region27: #{secondary_capsule_forward.1} parent=24 // pred_check_branch
        %362 = sbr.rel (0) target = $region29
      $region28: #{secondary_capsule_forward.1} parent=24 // pred_region
        // Predicated region
        $region30: #{secondary_capsule_forward.1} parent=28 // pred_check
          _
        $region31: #{secondary_capsule_forward.1} parent=28 // pred_check_branch
          %364 = sbr.rel target = $region33
        $region32: #{secondary_capsule_forward.1} parent=28 // pred_region
          // Predicated region
          $region45: #{secondary_capsule_forward.1} parent=32 // pred_check
            _
          $region46: #{secondary_capsule_forward.1} parent=32 // pred_check_branch
            %380 = sbr.rel (0) target = $region48
          $region47: #{secondary_capsule_forward.1} parent=32 // pred_region
            %s382 = ssub.s32 4, 1
            loop: start=0, step=1, limit=1
            $region49: #{secondary_capsule_forward.1} parent=47 // loop_pre_header
              _
            $region50: #{secondary_capsule_forward.1} parent=47 // loop_header
              %s384 = sphi 0, %s388
              %p385 = scmp.ge.s32.totalorder %s384, 1
              %s389 = sphi [#allocation6], [#allocation6]
              %s390 = sphi %s3, %s3
            $region51: #{secondary_capsule_forward.1} parent=47 // loop_header_branch
              %387 = sbr.rel (%p385) target = $region55
            $region52: #{secondary_capsule_forward.1} parent=47 // loop_body
              %v391 = vld [vmem:[%s389] sm:%s382]
              %392 = vst [vmem:[%s390] sm:%s382] %v391
            $region53: #{secondary_capsule_forward.1} parent=47 // loop_footer
              %s388 = sadd.s32 1, %s384
            $region54: #{secondary_capsule_forward.1} parent=47 // loop_footer_branch
              %383 = sbr.rel target = $region50
            $region55: #{secondary_capsule_forward.1} parent=47 // loop_exit
              _
          $region48: #{secondary_capsule_forward.1} parent=32 // pred_fallthru
            _
        $region33: #{secondary_capsule_forward.1} parent=28 // pred_fallthru
          _
        // Predicated region
        $region34: #{secondary_capsule_forward.1} parent=28 // pred_check
          _
        $region35: #{secondary_capsule_forward.1} parent=28 // pred_check_branch
          %366 = sbr.rel (0) target = $region37
        $region36: #{secondary_capsule_forward.1} parent=28 // pred_region
          %s368 = ssub.s32 4, 1
          loop: start=0, step=1, limit=1
          $region38: #{secondary_capsule_forward.1} parent=36 // loop_pre_header
            _
          $region39: #{secondary_capsule_forward.1} parent=36 // loop_header
            %s370 = sphi 0, %s374
            %p371 = scmp.ge.s32.totalorder %s370, 1
            %s375 = sphi [#allocation6], [#allocation6]
            %s376 = sphi %s3, %s3
          $region40: #{secondary_capsule_forward.1} parent=36 // loop_header_branch
            %373 = sbr.rel (%p371) target = $region44
          $region41: #{secondary_capsule_forward.1} parent=36 // loop_body
            %v377 = vld [vmem:[%s375] sm:%s368]
            %378 = vst [vmem:[%s376] sm:%s368] %v377
          $region42: #{secondary_capsule_forward.1} parent=36 // loop_footer
            %s374 = sadd.s32 1, %s370
          $region43: #{secondary_capsule_forward.1} parent=36 // loop_footer_branch
            %369 = sbr.rel target = $region39
          $region44: #{secondary_capsule_forward.1} parent=36 // loop_exit
            _
        $region37: #{secondary_capsule_forward.1} parent=28 // pred_fallthru
          _
      $region29: #{secondary_capsule_forward.1} parent=24 // pred_fallthru
        _
      %393 = vnop
    $region25: #{secondary_capsule_forward.1} parent=1 // pred_fallthru
      _
    // Predicated region
    $region56: #{secondary_capsule_forward.1} parent=1 // pred_check
      _
    $region57: #{secondary_capsule_forward.1} parent=1 // pred_check_branch
      %395 = sbr.rel (0) target = $region59
    $region58: #{secondary_capsule_forward.1} parent=1 // pred_region
      _
    $region59: #{secondary_capsule_forward.1} parent=1 // pred_fallthru
      _
    %396 = vsyncpa [#allocation3], 1
    %397 = vsyncpa [#allocation5], 1

</llo_original>
